<compile_context>
chip_gen: v5e
topology: v5e:2x2
jax: 0.10.0
libtpu: 0.0.40
codegen_flags: <defaults>
</compile_context>

<pallas_src>
import jax
import jax.numpy as jnp
from jax.experimental import pallas as pl
from jax.experimental.pallas import tpu as pltpu

# Module hyper-parameters implied by the Iris classifier.
INPUT_SIZE = 4      # iris features
HIDDEN1 = 32
HIDDEN2 = 16
OUTPUT = 3          # iris classes
BATCH = 8

LANES = 128

# --- f32 slab (VPU-consumed): W1 rows + bias rows, zero-padded. -------------
W1_OFF = 0                      # rows 0..3 : W1 (valid 4 x 32), rows 4..7 zero
B1_ROW = 8
B2_ROW = 9
B3_ROW = 10
WB_ROWS = 16                    # multiple of 8

# --- bf16 slab (MXU-consumed): W2 and W3 as full 128x128 zero-padded tiles. -
W2_OFF = 0                      # rows   0..127 : W2 (valid 32 x 16)
W3_OFF = LANES                  # rows 128..255 : W3 (valid 16 x 3)
W23_ROWS = 2 * LANES


def mlp_kernel(x_ref, wb_ref, w23_ref, o_ref):
    """Fused 3-layer MLP: VPU fc1 (K=4), MXU fc2, MXU fc3, masked log_softmax."""
    tb = x_ref.shape[0]

    x = x_ref[...]                               # (tb, 4) f32, natural shape

    # Single block load of the f32 W1/bias slab; all row slices are on the
    # in-register value (no per-row HBM/VMEM slices, no casts).
    wb = wb_ref[...]                             # (16, 128) f32
    b1 = wb[B1_ROW:B1_ROW + 1, :]
    b2 = wb[B2_ROW:B2_ROW + 1, :]
    b3 = wb[B3_ROW:B3_ROW + 1, :]

    # ---- fc1 + ReLU: K=4 -> two independent VPU partial sums (short chain).
    p0 = x[:, 0:1] * wb[W1_OFF + 0:W1_OFF + 1, :] + x[:, 2:3] * wb[W1_OFF + 2:W1_OFF + 3, :]
    p1 = x[:, 1:2] * wb[W1_OFF + 1:W1_OFF + 2, :] + x[:, 3:4] * wb[W1_OFF + 3:W1_OFF + 4, :]
    h1 = jnp.maximum(p0 + p1 + b1, 0.0)          # (tb, 128) f32; padded lanes stay 0

    # ---- fc2 + ReLU: full 128x128 padded tile on the MXU, bf16 operands, f32 acc.
    w2 = w23_ref[W2_OFF:W2_OFF + LANES, :]       # (128, 128) bf16, tile-aligned slice
    h2 = jnp.dot(h1.astype(jnp.bfloat16), w2, preferred_element_type=jnp.float32) + b2
    h2 = jnp.maximum(h2, 0.0)                    # (tb, 128) f32; padded lanes stay 0

    # ---- fc3: also on the MXU (replaces the former 16-deep serial MAC chain).
    w3 = w23_ref[W3_OFF:W3_OFF + LANES, :]       # (128, 128) bf16, tile-aligned slice
    logits = jnp.dot(h2.astype(jnp.bfloat16), w3, preferred_element_type=jnp.float32) + b3

    # ---- log_softmax over the 3 real classes only (padded lanes masked out of
    # the reductions).  Reductions -> XLU, exp/log -> EUP.  Keep in f32.
    lane = jax.lax.broadcasted_iota(jnp.int32, (tb, LANES), 1)
    valid = lane < OUTPUT
    masked = jnp.where(valid, logits, jnp.float32(-1e30))
    m = jnp.max(masked, axis=-1, keepdims=True)
    shifted = masked - m
    lse = jnp.log(jnp.sum(jnp.exp(shifted), axis=-1, keepdims=True))
    o_ref[...] = jnp.where(valid, shifted - lse, 0.0)   # lane-dense store


def pack_params(params):
    """Pack (w1, b1, w2, b2, w3, b3) into:
       wb_f32  (16, 128)  f32 : W1 rows 0..3, biases rows 8..10 (VPU path)
       w23_bf16 (256,128) bf16: W2 rows 0..127, W3 rows 128..255 (MXU path)."""
    w1, b1, w2, b2, w3, b3 = params

    wb = jnp.zeros((WB_ROWS, LANES), jnp.float32)
    wb = wb.at[W1_OFF:W1_OFF + INPUT_SIZE, :HIDDEN1].set(w1.astype(jnp.float32))
    wb = wb.at[B1_ROW, :HIDDEN1].set(b1.reshape(-1).astype(jnp.float32))
    wb = wb.at[B2_ROW, :HIDDEN2].set(b2.reshape(-1).astype(jnp.float32))
    wb = wb.at[B3_ROW, :OUTPUT].set(b3.reshape(-1).astype(jnp.float32))

    w23 = jnp.zeros((W23_ROWS, LANES), jnp.float32)
    w23 = w23.at[W2_OFF:W2_OFF + HIDDEN1, :HIDDEN2].set(w2.astype(jnp.float32))
    w23 = w23.at[W3_OFF:W3_OFF + HIDDEN2, :OUTPUT].set(w3.astype(jnp.float32))
    return wb, w23.astype(jnp.bfloat16)


def _round_up(n, m):
    return ((n + m - 1) // m) * m


def linear_model_forward(x, wb_f32, w23_bf16, *, block_b=512):
    """x: (B, 4) f32 logical input (natural shape, no lane padding)."""
    B = x.shape[0]
    tb = min(block_b, _round_up(B, 8))           # f32 input -> sublane multiple of 8
    B_pad = _round_up(B, tb)
    if B_pad != B:
        x = jnp.pad(x, ((0, B_pad - B), (0, 0)))  # rows only; tiny (B,4) buffer

    out_p = pl.pallas_call(
        mlp_kernel,
        out_shape=jax.ShapeDtypeStruct((B_pad, LANES), jnp.float32),
        grid=(B_pad // tb,),
        in_specs=[
            # x: blocked over batch rows; last dim == full array dim (4).
            pl.BlockSpec((tb, INPUT_SIZE), lambda i: (i, 0)),
            # Weight slabs: constant index_map -> DMA'd once, VMEM-resident.
            pl.BlockSpec((WB_ROWS, LANES), lambda i: (0, 0)),
            pl.BlockSpec((W23_ROWS, LANES), lambda i: (0, 0)),
        ],
        out_specs=pl.BlockSpec((tb, LANES), lambda i: (i, 0)),
        compiler_params=pltpu.CompilerParams(
            dimension_semantics=("parallel",)),   # dual-TC sharding on v7x
    )(x, wb_f32, w23_bf16)

    return out_p[:B, :OUTPUT]


def init_params(key):
    """Deterministic init; mimics nn.Linear's U(-1/sqrt(fan_in), 1/sqrt(fan_in)).
    Weights stored as (in, out) so the math is x @ W + b (== torch x @ W.T + b)."""
    def linear(key, fan_in, fan_out):
        kw, kb = jax.random.split(key)
        bound = 1.0 / jnp.sqrt(fan_in)
        w = jax.random.uniform(kw, (fan_in, fan_out), jnp.float32, -bound, bound)
        b = jax.random.uniform(kb, (fan_out,), jnp.float32, -bound, bound)
        return w, b

    k1, k2, k3 = jax.random.split(key, 3)
    w1, b1 = linear(k1, INPUT_SIZE, HIDDEN1)
    w2, b2 = linear(k2, HIDDEN1, HIDDEN2)
    w3, b3 = linear(k3, HIDDEN2, OUTPUT)
    return (w1, b1, w2, b2, w3, b3)


def reference_forward(x, params):
    """Pure-JAX reference emulating the kernel numerics: f32 fc1/biases,
    bf16-rounded W2/W3 and bf16 rounding of h1/h2 before the MXU dots."""
    w1, b1, w2, b2, w3, b3 = params
    w2 = w2.astype(jnp.bfloat16).astype(jnp.float32)
    w3 = w3.astype(jnp.bfloat16).astype(jnp.float32)
    h1 = jnp.maximum(x @ w1 + b1, 0.0)
    h1 = h1.astype(jnp.bfloat16).astype(jnp.float32)
    h2 = jnp.maximum(h1 @ w2 + b2, 0.0)
    h2 = h2.astype(jnp.bfloat16).astype(jnp.float32)
    logits = h2 @ w3 + b3
    return jax.nn.log_softmax(logits, axis=1)


if __name__ == "__main__":
    key = jax.random.PRNGKey(0)
    kx, kp = jax.random.split(key)

    params = init_params(kp)
    wb_f32, w23_bf16 = pack_params(params)

    # Small batch (matches the Iris setting); single grid step.
    x = jax.random.normal(kx, (BATCH, INPUT_SIZE), jnp.float32)
    out = jax.block_until_ready(linear_model_forward(x, wb_f32, w23_bf16))
    ref = reference_forward(x, params)
    assert out.shape == (BATCH, OUTPUT)
    assert jnp.allclose(out, ref, atol=2e-4, rtol=2e-4), "mismatch vs. JAX reference"
    assert jnp.allclose(jnp.sum(jnp.exp(out), axis=1), 1.0, atol=1e-4)

    # Exercise the multi-step batch grid + row-padding path (still tiny shapes).
    x2 = jax.random.normal(jax.random.fold_in(kx, 1), (20, INPUT_SIZE), jnp.float32)
    out2 = jax.block_until_ready(linear_model_forward(x2, wb_f32, w23_bf16, block_b=8))
    ref2 = reference_forward(x2, params)
    assert out2.shape == (20, OUTPUT)
    assert jnp.allclose(out2, ref2, atol=2e-4, rtol=2e-4), "grid-path mismatch vs. reference"

    print("KERNEL_OK")
</pallas_src>

<mosaic_0001>
module attributes {stable_mosaic.version = 11 : i64} {
  func.func @mlp_kernel(%arg0: i32, %arg1: memref<8x4xf32, #tpu.memory_space<vmem>>, %arg2: memref<16x128xf32, #tpu.memory_space<vmem>>, %arg3: memref<256x128xbf16, #tpu.memory_space<vmem>>, %arg4: memref<8x128xf32, #tpu.memory_space<vmem>>) attributes {dimension_semantics = [#tpu.dimension_semantics<parallel>], iteration_bounds = array<i64: 1>, scalar_prefetch = 0 : i64, scratch_operands = 0 : i64, tpu.core_type = #tpu.core_type<tc>, window_params = [{transform_indices = @transform_0, window_bounds = array<i64: 8, 4>}, {pipeline_mode = #tpu.pipeline_mode<synchronous>, transform_indices = @transform_1, window_bounds = array<i64: 16, 128>}, {pipeline_mode = #tpu.pipeline_mode<synchronous>, transform_indices = @transform_2, window_bounds = array<i64: 256, 128>}, {transform_indices = @transform_3, window_bounds = array<i64: 8, 128>}]} {
    %c0 = arith.constant 0 : index
    %c0_0 = arith.constant 0 : index
    %0 = vector.load %arg1[%c0, %c0_0] : memref<8x4xf32, #tpu.memory_space<vmem>>, vector<8x4xf32>
    %c0_1 = arith.constant 0 : index
    %c0_2 = arith.constant 0 : index
    %1 = vector.load %arg2[%c0_1, %c0_2] : memref<16x128xf32, #tpu.memory_space<vmem>>, vector<16x128xf32>
    %2 = vector.extract_strided_slice %1 {offsets = [8, 0], sizes = [1, 128], strides = [1, 1]} : vector<16x128xf32> to vector<1x128xf32>
    %3 = vector.extract_strided_slice %1 {offsets = [9, 0], sizes = [1, 128], strides = [1, 1]} : vector<16x128xf32> to vector<1x128xf32>
    %4 = vector.extract_strided_slice %1 {offsets = [10, 0], sizes = [1, 128], strides = [1, 1]} : vector<16x128xf32> to vector<1x128xf32>
    %5 = vector.extract_strided_slice %0 {offsets = [0, 0], sizes = [8, 1], strides = [1, 1]} : vector<8x4xf32> to vector<8x1xf32>
    %6 = vector.extract_strided_slice %1 {offsets = [0, 0], sizes = [1, 128], strides = [1, 1]} : vector<16x128xf32> to vector<1x128xf32>
    %7 = vector.broadcast %5 : vector<8x1xf32> to vector<8x128xf32>
    %8 = vector.broadcast %6 : vector<1x128xf32> to vector<8x128xf32>
    %9 = arith.mulf %7, %8 : vector<8x128xf32>
    %10 = vector.extract_strided_slice %0 {offsets = [0, 2], sizes = [8, 1], strides = [1, 1]} : vector<8x4xf32> to vector<8x1xf32>
    %11 = vector.extract_strided_slice %1 {offsets = [2, 0], sizes = [1, 128], strides = [1, 1]} : vector<16x128xf32> to vector<1x128xf32>
    %12 = vector.broadcast %10 : vector<8x1xf32> to vector<8x128xf32>
    %13 = vector.broadcast %11 : vector<1x128xf32> to vector<8x128xf32>
    %14 = arith.mulf %12, %13 : vector<8x128xf32>
    %15 = arith.addf %9, %14 : vector<8x128xf32>
    %16 = vector.extract_strided_slice %0 {offsets = [0, 1], sizes = [8, 1], strides = [1, 1]} : vector<8x4xf32> to vector<8x1xf32>
    %17 = vector.extract_strided_slice %1 {offsets = [1, 0], sizes = [1, 128], strides = [1, 1]} : vector<16x128xf32> to vector<1x128xf32>
    %18 = vector.broadcast %16 : vector<8x1xf32> to vector<8x128xf32>
    %19 = vector.broadcast %17 : vector<1x128xf32> to vector<8x128xf32>
    %20 = arith.mulf %18, %19 : vector<8x128xf32>
    %21 = vector.extract_strided_slice %0 {offsets = [0, 3], sizes = [8, 1], strides = [1, 1]} : vector<8x4xf32> to vector<8x1xf32>
    %22 = vector.extract_strided_slice %1 {offsets = [3, 0], sizes = [1, 128], strides = [1, 1]} : vector<16x128xf32> to vector<1x128xf32>
    %23 = vector.broadcast %21 : vector<8x1xf32> to vector<8x128xf32>
    %24 = vector.broadcast %22 : vector<1x128xf32> to vector<8x128xf32>
    %25 = arith.mulf %23, %24 : vector<8x128xf32>
    %26 = arith.addf %20, %25 : vector<8x128xf32>
    %27 = arith.addf %15, %26 : vector<8x128xf32>
    %28 = vector.broadcast %2 : vector<1x128xf32> to vector<8x128xf32>
    %29 = arith.addf %27, %28 : vector<8x128xf32>
    %cst = arith.constant 0.000000e+00 : f32
    %30 = vector.broadcast %cst : f32 to vector<8x128xf32>
    %31 = arith.maximumf %29, %30 : vector<8x128xf32>
    %c0_3 = arith.constant 0 : index
    %c0_4 = arith.constant 0 : index
    %32 = vector.load %arg3[%c0_3, %c0_4] : memref<256x128xbf16, #tpu.memory_space<vmem>>, vector<128x128xbf16>
    %33 = arith.truncf %31 : vector<8x128xf32> to vector<8x128xbf16>
    %cst_5 = arith.constant dense<0.000000e+00> : vector<8x128xf32>
    %34 = tpu.matmul %33, %32, %cst_5 {dimension_numbers = #tpu.dot_dimension_numbers<[1], [0], [0], [1], [0, 0, 1, 1], [], []>} : vector<8x128xbf16>, vector<128x128xbf16>, vector<8x128xf32> -> vector<8x128xf32>
    %35 = vector.broadcast %3 : vector<1x128xf32> to vector<8x128xf32>
    %36 = arith.addf %34, %35 : vector<8x128xf32>
    %cst_6 = arith.constant 0.000000e+00 : f32
    %37 = vector.broadcast %cst_6 : f32 to vector<8x128xf32>
    %38 = arith.maximumf %36, %37 : vector<8x128xf32>
    %c128 = arith.constant 128 : index
    %c0_7 = arith.constant 0 : index
    %39 = vector.load %arg3[%c128, %c0_7] : memref<256x128xbf16, #tpu.memory_space<vmem>>, vector<128x128xbf16>
    %40 = arith.truncf %38 : vector<8x128xf32> to vector<8x128xbf16>
    %cst_8 = arith.constant dense<0.000000e+00> : vector<8x128xf32>
    %41 = tpu.matmul %40, %39, %cst_8 {dimension_numbers = #tpu.dot_dimension_numbers<[1], [0], [0], [1], [0, 0, 1, 1], [], []>} : vector<8x128xbf16>, vector<128x128xbf16>, vector<8x128xf32> -> vector<8x128xf32>
    %42 = vector.broadcast %4 : vector<1x128xf32> to vector<8x128xf32>
    %43 = arith.addf %41, %42 : vector<8x128xf32>
    %44 = tpu.iota {dimensions = array<i32: 1>} : vector<8x128xi32>
    %c3_i32 = arith.constant 3 : i32
    %45 = vector.broadcast %c3_i32 : i32 to vector<8x128xi32>
    %46 = arith.cmpi slt, %44, %45 : vector<8x128xi32>
    %cst_9 = arith.constant -1.000000e+30 : f32
    %47 = vector.broadcast %cst_9 : f32 to vector<8x128xf32>
    %48 = arith.select %46, %43, %47 : vector<8x128xi1>, vector<8x128xf32>
    %cst_10 = arith.constant dense<0xFF800000> : vector<8xf32>
    %49 = vector.multi_reduction <maximumf>, %48, %cst_10 [1] : vector<8x128xf32> to vector<8xf32>
    %50 = vector.shape_cast %49 : vector<8xf32> to vector<8x1xf32>
    %51 = vector.broadcast %50 : vector<8x1xf32> to vector<8x128xf32>
    %52 = arith.subf %48, %51 : vector<8x128xf32>
    %53 = math.exp %52 : vector<8x128xf32>
    %cst_11 = arith.constant dense<0.000000e+00> : vector<8xf32>
    %54 = vector.multi_reduction <add>, %53, %cst_11 [1] : vector<8x128xf32> to vector<8xf32>
    %55 = vector.shape_cast %54 : vector<8xf32> to vector<8x1xf32>
    %56 = math.log %55 : vector<8x1xf32>
    %57 = vector.broadcast %56 : vector<8x1xf32> to vector<8x128xf32>
    %58 = arith.subf %52, %57 : vector<8x128xf32>
    %cst_12 = arith.constant 0.000000e+00 : f32
    %59 = vector.broadcast %cst_12 : f32 to vector<8x128xf32>
    %60 = arith.select %46, %58, %59 : vector<8x128xi1>, vector<8x128xf32>
    %c0_13 = arith.constant 0 : index
    %c0_14 = arith.constant 0 : index
    %61 = vector.load %arg4[%c0_13, %c0_14] : memref<8x128xf32, #tpu.memory_space<vmem>>, vector<8x128xf32>
    tpu.vector_store %arg4[%c0_13, %c0_14], %60 {strides = array<i32>} : memref<8x128xf32, #tpu.memory_space<vmem>>, vector<8x128xf32>,
    return
  }
  func.func @transform_0(%arg0: i32) -> (i32, i32) {
    %c0_i32 = arith.constant 0 : i32
    %c0_i32_0 = arith.constant 0 : i32
    return %arg0, %c0_i32 : i32, i32
  }
  func.func @transform_1(%arg0: i32) -> (i32, i32) {
    %c0_i32 = arith.constant 0 : i32
    %c0_i32_0 = arith.constant 0 : i32
    %c0_i32_1 = arith.constant 0 : i32
    return %c0_i32, %c0_i32_0 : i32, i32
  }
  func.func @transform_2(%arg0: i32) -> (i32, i32) {
    %c0_i32 = arith.constant 0 : i32
    %c0_i32_0 = arith.constant 0 : i32
    %c0_i32_1 = arith.constant 0 : i32
    return %c0_i32, %c0_i32_0 : i32, i32
  }
  func.func @transform_3(%arg0: i32) -> (i32, i32) {
    %c0_i32 = arith.constant 0 : i32
    %c0_i32_0 = arith.constant 0 : i32
    return %arg0, %c0_i32 : i32, i32
  }
}

</mosaic_0001>

<llo_original>
// kernel: tpu_custom_call.1
$region0: #{tpu_custom_call.1}
  #allocation0 [shape = 'u32[]', space=smem, size = 0x4, offset = 0x4, fixed_abs, tag = 'smem constant byte address 0x4 - core index']
  #allocation1 [shape = 'u32[72,128]{1,0:T(1,128)}', space=vmem, size = 0x9000, scoped, tag = 'internal scratch']
  %s0 = inlined_call_operand.vmem [shape: f32[8,4], index: 0, kind: input, shape index: {}]
  %s1 = inlined_call_operand.hbm [shape: f32[16,128], index: 1, kind: input, shape index: {}]
  %s2 = inlined_call_operand.hbm [shape: bf16[256,128], index: 2, kind: input, shape index: {}]
  %s3 = inlined_call_operand.hbm [shape: f32[8,128], index: 3, kind: output, shape index: {}]
  %s4 = sld [smem:[#allocation0]]
  $region30: #{tpu_custom_call.1} parent=0
    _
  %s6 = ssub.s32 1, %s4
  %s7 = scalar_select 0, %s6, %s4
  $region1: #{tpu_custom_call.1} parent=0
    #allocation2 [shape = 'u8[8192]{0}', space=vmem, size = 0x2000, scoped, tag = 'input window, operand 1, single buffered']
    #allocation3 [shape = 's32[1]{0}', space=sflag, size = 0x4, scoped, tag = 'scoped memory for tpu_custom_call.1']
    #allocation4 [shape = 's32[1]{0}', space=sflag, size = 0x4, scoped, tag = 'scoped memory for tpu_custom_call.1']
    #allocation5 [shape = 'u8[65536]{0}', space=vmem, size = 0x10000, scoped, tag = 'input window, operand 2, single buffered']
    #allocation6 [shape = 's32[1]{0}', space=sflag, size = 0x4, scoped, tag = 'scoped memory for tpu_custom_call.1']
    #allocation7 [shape = 'u8[4096]{0}', space=vmem, size = 0x1000, scoped, tag = 'output window, operand 0, single buffered']
    %8 = vsyncpa [#allocation3], 0
    %9 = vsyncpa [#allocation6], 0
    %10 = vsyncpa [#allocation4], 0
    // Predicated region
    $region2: #{tpu_custom_call.1} parent=1 // pred_check
      _
    $region3: #{tpu_custom_call.1} parent=1 // pred_check_branch
      %12 = sbr.rel (0) target = $region5
    $region4: #{tpu_custom_call.1} parent=1 // pred_region
      _
    $region5: #{tpu_custom_call.1} parent=1 // pred_fallthru
      _
    // Predicated region
    $region6: #{tpu_custom_call.1} parent=1 // pred_check
      _
    $region7: #{tpu_custom_call.1} parent=1 // pred_check_branch
      %14 = sbr.rel (0) target = $region9
    $region8: #{tpu_custom_call.1} parent=1 // pred_region
      %16 = vsyncadd [#allocation3], 0
      %s17 = sshll.u32 %s1, 4
      %s18 = int_to_ptr.hbm [resolvable:$true] %s17
      %s19 = sshll.u32 [#allocation2], 4
      %s20 = int_to_ptr.vmem [resolvable:$true] %s19
      %25 = dma.hbm_to_vmem [thread:$0]  %s18, 256, %s20, [#allocation3], 128, 128, 8
    $region9: #{tpu_custom_call.1} parent=1 // pred_fallthru
      _
    // Predicated region
    $region10: #{tpu_custom_call.1} parent=1 // pred_check
      _
    $region11: #{tpu_custom_call.1} parent=1 // pred_check_branch
      %27 = sbr.rel (0) target = $region13
    $region12: #{tpu_custom_call.1} parent=1 // pred_region
      %29 = vsyncadd [#allocation6], 0
      %s30 = sshll.u32 %s2, 4
      %s31 = int_to_ptr.hbm [resolvable:$true] %s30
      %s32 = sshll.u32 [#allocation5], 4
      %s33 = int_to_ptr.vmem [resolvable:$true] %s32
      %38 = dma.hbm_to_vmem [thread:$0]  %s31, 2048, %s33, [#allocation6], 64, 64, 4
    $region13: #{tpu_custom_call.1} parent=1 // pred_fallthru
      _
    // Predicated region
    $region14: #{tpu_custom_call.1} parent=1 // pred_check
      _
    $region15: #{tpu_custom_call.1} parent=1 // pred_check_branch
      %40 = sbr.rel (0) target = $region17
    $region16: #{tpu_custom_call.1} parent=1 // pred_region
      %42 = dma.done [#allocation3], 256
    $region17: #{tpu_custom_call.1} parent=1 // pred_fallthru
      _
    // Predicated region
    $region18: #{tpu_custom_call.1} parent=1 // pred_check
      _
    $region19: #{tpu_custom_call.1} parent=1 // pred_check_branch
      %44 = sbr.rel (0) target = $region21
    $region20: #{tpu_custom_call.1} parent=1 // pred_region
      %46 = dma.done [#allocation6], 2048
    $region21: #{tpu_custom_call.1} parent=1 // pred_fallthru
      _
    %v47 = vld [vmem:[%s0] sm:$0xff]
    %v48 = vld [vmem:[#allocation2] sm:$0xff]
    %v49 = vld [vmem:[#allocation2 + $0x8] sm:$0xff]
    %51 = vset.pattern.permute.xlu0 0
    %52 = vperm.xlu0 %51, %v47
    %v53 = vpop.permute.xlu0 %52
    %v55 = vperm.slane %v48, 0
    %v56 = vmul.f32 %v53, %v55
    %57 = vset.pattern.permute.xlu0 2
    %58 = vperm.xlu0 %57, %v47
    %v59 = vpop.permute.xlu0 %58
    %v61 = vperm.slane %v48, 2
    %v62 = vmul.f32 %v59, %v61
    %v63 = vadd.f32 %v56, %v62
    %64 = vset.pattern.permute.xlu0 1
    %65 = vperm.xlu0 %64, %v47
    %v66 = vpop.permute.xlu0 %65
    %v68 = vperm.slane %v48, 1
    %v69 = vmul.f32 %v66, %v68
    %70 = vset.pattern.permute.xlu0 3
    %71 = vperm.xlu0 %70, %v47
    %v72 = vpop.permute.xlu0 %71
    %v74 = vperm.slane %v48, 3
    %v75 = vmul.f32 %v72, %v74
    %v76 = vadd.f32 %v69, %v75
    %v77 = vadd.f32 %v63, %v76
    %v78 = vperm.slane %v49, 0
    %v79 = vadd.f32 %v77, %v78
    %v80 = vmax.f32 %v79, 0.0
    %v81 = vld [vmem:[#allocation5] sm:$0xf]
    %v82 = vld [vmem:[#allocation5 + $0x4] sm:$0xf]
    %v83 = vld [vmem:[#allocation5 + $0x8] sm:$0xf]
    %v84 = vld [vmem:[#allocation5 + $0xc] sm:$0xf]
    %v85 = vld [vmem:[#allocation5 + $0x10] sm:$0xf]
    %v86 = vld [vmem:[#allocation5 + $0x14] sm:$0xf]
    %v87 = vld [vmem:[#allocation5 + $0x18] sm:$0xf]
    %v88 = vld [vmem:[#allocation5 + $0x1c] sm:$0xf]
    %v89 = vld [vmem:[#allocation5 + $0x20] sm:$0xf]
    %v90 = vld [vmem:[#allocation5 + $0x24] sm:$0xf]
    %v91 = vld [vmem:[#allocation5 + $0x28] sm:$0xf]
    %v92 = vld [vmem:[#allocation5 + $0x2c] sm:$0xf]
    %v93 = vld [vmem:[#allocation5 + $0x30] sm:$0xf]
    %v94 = vld [vmem:[#allocation5 + $0x34] sm:$0xf]
    %v95 = vld [vmem:[#allocation5 + $0x38] sm:$0xf]
    %v96 = vld [vmem:[#allocation5 + $0x3c] sm:$0xf]
    %v97 = vpack.c.bf16 %v80, %v80
    %v98 = vperm.slane %v49, 1
    %v115 = vunpack.c.l.b16 %v81
    %v116 = vunpack.c.l.b16 %v82
    %v117 = vunpack.c.l.b16 %v83
    %v118 = vunpack.c.l.b16 %v84
    %v119 = vunpack.c.l.b16 %v85
    %v120 = vunpack.c.l.b16 %v86
    %v121 = vunpack.c.l.b16 %v87
    %v122 = vunpack.c.l.b16 %v88
    %v123 = vunpack.c.l.b16 %v89
    %v124 = vunpack.c.l.b16 %v90
    %v125 = vunpack.c.l.b16 %v91
    %v126 = vunpack.c.l.b16 %v92
    %v127 = vunpack.c.l.b16 %v93
    %v128 = vunpack.c.l.b16 %v94
    %v129 = vunpack.c.l.b16 %v95
    %v130 = vunpack.c.l.b16 %v96
    %v131 = vpack.c.b16 %v116, %v115
    %v132 = vpack.c.b16 %v118, %v117
    %v133 = vpack.c.b16 %v120, %v119
    %v134 = vpack.c.b16 %v122, %v121
    %v135 = vpack.c.b16 %v124, %v123
    %v136 = vpack.c.b16 %v126, %v125
    %v137 = vpack.c.b16 %v128, %v127
    %v138 = vpack.c.b16 %v130, %v129
    %147 = vmatpush.bf16.msra.mxu0 %v138
    %148 = vmatpush.bf16.msra.mxu0 %v137
    %149 = vmatpush.bf16.msra.mxu0 %v136
    %150 = vmatpush.bf16.msra.mxu0 %v135
    %151 = vmatpush.bf16.msra.mxu0 %v134
    %152 = vmatpush.bf16.msra.mxu0 %v133
    %153 = vmatpush.bf16.msra.mxu0 %v132
    %154 = vmatpush.bf16.msra.mxu0 %v131
    %155 = vmatmul.bf16.gmra.mxu0 %v97
    %v156 = vpop.f32.mrf.mxu0
    %v157 = vadd.f32 %v98, %v156
    %v158 = vpop.f32.mrf.mxu0
    %159 = vdwg.mxu0
    %v160 = vmax.f32 %v157, 0.0
    %v161 = vld [vmem:[#allocation5 + $0x40] sm:$0xf]
    %v162 = vld [vmem:[#allocation5 + $0x44] sm:$0xf]
    %v163 = vld [vmem:[#allocation5 + $0x48] sm:$0xf]
    %v164 = vld [vmem:[#allocation5 + $0x4c] sm:$0xf]
    %v165 = vld [vmem:[#allocation5 + $0x50] sm:$0xf]
    %v166 = vld [vmem:[#allocation5 + $0x54] sm:$0xf]
    %v167 = vld [vmem:[#allocation5 + $0x58] sm:$0xf]
    %v168 = vld [vmem:[#allocation5 + $0x5c] sm:$0xf]
    %v169 = vld [vmem:[#allocation5 + $0x60] sm:$0xf]
    %v170 = vld [vmem:[#allocation5 + $0x64] sm:$0xf]
    %v171 = vld [vmem:[#allocation5 + $0x68] sm:$0xf]
    %v172 = vld [vmem:[#allocation5 + $0x6c] sm:$0xf]
    %v173 = vld [vmem:[#allocation5 + $0x70] sm:$0xf]
    %v174 = vld [vmem:[#allocation5 + $0x74] sm:$0xf]
    %v175 = vld [vmem:[#allocation5 + $0x78] sm:$0xf]
    %v176 = vld [vmem:[#allocation5 + $0x7c] sm:$0xf]
    %v177 = vpack.c.bf16 %v160, %v160
    %v178 = vperm.slane %v49, 2
    %v195 = vunpack.c.l.b16 %v161
    %v196 = vunpack.c.l.b16 %v162
    %v197 = vunpack.c.l.b16 %v163
    %v198 = vunpack.c.l.b16 %v164
    %v199 = vunpack.c.l.b16 %v165
    %v200 = vunpack.c.l.b16 %v166
    %v201 = vunpack.c.l.b16 %v167
    %v202 = vunpack.c.l.b16 %v168
    %v203 = vunpack.c.l.b16 %v169
    %v204 = vunpack.c.l.b16 %v170
    %v205 = vunpack.c.l.b16 %v171
    %v206 = vunpack.c.l.b16 %v172
    %v207 = vunpack.c.l.b16 %v173
    %v208 = vunpack.c.l.b16 %v174
    %v209 = vunpack.c.l.b16 %v175
    %v210 = vunpack.c.l.b16 %v176
    %v211 = vpack.c.b16 %v196, %v195
    %v212 = vpack.c.b16 %v198, %v197
    %v213 = vpack.c.b16 %v200, %v199
    %v214 = vpack.c.b16 %v202, %v201
    %v215 = vpack.c.b16 %v204, %v203
    %v216 = vpack.c.b16 %v206, %v205
    %v217 = vpack.c.b16 %v208, %v207
    %v218 = vpack.c.b16 %v210, %v209
    %227 = vmatpush.bf16.msra.mxu0 %v218
    %228 = vmatpush.bf16.msra.mxu0 %v217
    %229 = vmatpush.bf16.msra.mxu0 %v216
    %230 = vmatpush.bf16.msra.mxu0 %v215
    %231 = vmatpush.bf16.msra.mxu0 %v214
    %232 = vmatpush.bf16.msra.mxu0 %v213
    %233 = vmatpush.bf16.msra.mxu0 %v212
    %234 = vmatpush.bf16.msra.mxu0 %v211
    %235 = vmatmul.bf16.gmra.mxu0 %v177
    %v236 = vpop.f32.mrf.mxu0
    %v237 = vadd.f32 %v178, %v236
    %v238 = vpop.f32.mrf.mxu0
    %239 = vdwg.mxu0
    %v240 = vlaneseq
    %v241 = vand.u32 %v240, 127
    %vm242 = vcmp.lt.s32.totalorder %v241, 3
    %v243 = vsel %vm242, %v237, -1e+30
    %244 = vmax.xlane.f32.xlu0 %v243
    %v245 = vpop.xlane.xlu0 %244
    %v246 = vsub.f32 %v243, %v245
    %v247 = vmul.f32 %v246, 1.442695
    %v248 = vpow.pop %v247
    %249 = vadd.xlane.f32.xlu0 %v248
    %v250 = vpop.xlane.xlu0 %249
    %v251 = vlog2.pop %v250
    %v252 = vmul.f32 %v251, 0.6931472
    %v253 = vsub.f32 %v246, %v252
    %v254 = vsel %vm242, %v253, 0.0
    %255 = vst [vmem:[#allocation7] sm:$0xff] %v254
    // Predicated region
    $region22: #{tpu_custom_call.1} parent=1 // pred_check
      _
    $region23: #{tpu_custom_call.1} parent=1 // pred_check_branch
      %257 = sbr.rel (0) target = $region25
    $region24: #{tpu_custom_call.1} parent=1 // pred_region
      %259 = vsyncadd [#allocation4], 0
      %s261 = sshll.u32 [#allocation7], 4
      %s262 = int_to_ptr.vmem [resolvable:$true] %s261
      %s263 = sshll.u32 %s3, 4
      %s264 = int_to_ptr.hbm [resolvable:$true] %s263
      %266 = dma.vmem_to_hbm [thread:$0]  %s262, 128, %s264, [#allocation4]
    $region25: #{tpu_custom_call.1} parent=1 // pred_fallthru
      _
    // Predicated region
    $region26: #{tpu_custom_call.1} parent=1 // pred_check
      _
    $region27: #{tpu_custom_call.1} parent=1 // pred_check_branch
      %268 = sbr.rel (0) target = $region29
    $region28: #{tpu_custom_call.1} parent=1 // pred_region
      %270 = dma.done [#allocation4], 128
    $region29: #{tpu_custom_call.1} parent=1 // pred_fallthru
      _
    %271 = vsyncpa [#allocation3], 1
    %272 = vsyncpa [#allocation6], 1
    %273 = vsyncpa [#allocation4], 1

</llo_original>
